<compile_context>
chip_gen: v6e
topology: v6e:2x2x1
jax: 0.10.0
libtpu: 0.0.40
codegen_flags: <defaults>
</compile_context>

<pallas_src>
import functools
import math

import jax
import jax.numpy as jnp
from jax.experimental import pallas as pl
from jax.experimental.pallas import tpu as pltpu

_LOG2PI = math.log(2.0 * math.pi)


def _round_up(n, m):
    return ((n + m - 1) // m) * m


def _vmem_capacity_bytes():
    """Physical VMEM per TensorCore; conservative v7x default if the query fails
    (e.g. CPU interpret mode)."""
    try:
        return int(pltpu.get_tpu_info().vmem_capacity_bytes)
    except Exception:
        return 64 * 1024 * 1024


def _auto_tile(din, ac, vmem_budget_bytes):
    """Largest batch tile whose double-buffered f32 blocks fit the VMEM budget."""
    per_row = 4 * 2 * (din + 2 * ac)           # x + noise + out, double-buffered
    resident = 4 * (din * ac + 8 * ac)         # W + params slab
    tile = (vmem_budget_bytes - resident) // max(per_row, 1)
    tile = int(max(128, min(2048, tile)))      # streaming kernels plateau ~1024-2048
    tile -= tile % 128
    return tile


def _act_core(x_ref, w_ref, params_ref, out_ref, noise_ref, action_dim):
    rows, ac = out_ref.shape

    b_row = params_ref[0:1, :]       # [1, AC] bias            (padded cols are 0)
    std_row = params_ref[1:2, :]     # [1, AC] exp(log_std)    (padded cols are 0)
    c = params_ref[2:3, 0:1]         # [1, 1]  sum(log_std) + 0.5*A*log(2*pi)

    # Linear layer on the MXU with f32 accumulate.  Compute is negligible: this
    # kernel is HBM-streaming bound on x.
    mean = jnp.dot(x_ref[...], w_ref[...], preferred_element_type=jnp.float32) + b_row

    if noise_ref is None:
        # Deterministic: actions == mean, logp == -c per row.  No noise stream,
        # no PRNG / extra VPU work on this path.
        action = mean
        logp = jnp.zeros((rows, 1), jnp.float32) - c
    else:
        noise = noise_ref[...]                 # [rows, AC], padded cols are 0
        action = mean + std_row * noise
        # (action - mean) == std * noise exactly, so the DiagGaussian log-prob
        # simplifies to -0.5*sum(noise^2) - (sum(log_std) + 0.5*A*log(2*pi)).
        logp = -0.5 * jnp.sum(noise * noise, axis=-1, keepdims=True) - c

    # Pack actions (cols < A) and the per-row log-prob (col == A) into one slab
    # so a single output block / writeback DMA carries both.
    col = jax.lax.broadcasted_iota(jnp.int32, (rows, ac), 1)
    out_ref[...] = jnp.where(col < action_dim, action,
                             jnp.where(col == action_dim, logp, 0.0))


def _act_kernel_stochastic(x_ref, noise_ref, w_ref, params_ref, out_ref, *, action_dim):
    _act_core(x_ref, w_ref, params_ref, out_ref, noise_ref, action_dim)


def _act_kernel_deterministic(x_ref, w_ref, params_ref, out_ref, *, action_dim):
    _act_core(x_ref, w_ref, params_ref, out_ref, None, action_dim)


def act_layer_forward(x, w, b, log_std, *, deterministic=False, key=None, tile_b=None):
    """Pallas forward for ACTLayer: returns (actions [B, A], action_log_probs [B, 1]).

    x        : [B, Din]  network features (streamed as-is, no wrapper copy)
    w        : [Din, A]  Linear weight, pre-transposed (PyTorch stores [A, Din])
    b        : [A]       Linear bias
    log_std  : [A]       learned log-std parameter
    key      : PRNG key for the Gaussian noise (stochastic mode only)
    """
    B, din = x.shape
    A = w.shape[1]
    ac = _round_up(A + 1, 8)                   # actions + logp column, lane-padded

    # --- tiling: biggest batch tile the per-generation VMEM budget allows ------
    cap = _vmem_capacity_bytes()               # 64 MiB on v7x, 128 MiB on v5e/v6e
    vmem_limit = int(min(cap * 3 // 4, 96 * 1024 * 1024))
    tile = tile_b if tile_b is not None else _auto_tile(din, ac, int(vmem_limit * 0.85))
    tile = max(8, tile - tile % 8)
    if B > 512:                                # guarantee >=2 grid steps (v7x megacore)
        tile = min(tile, _round_up((B + 1) // 2, 8))
    if B <= tile:
        tile = B                               # single block covering the whole batch
    num_tiles = pl.cdiv(B, tile)               # ragged last tile handled by Pallas

    # --- small, loop-invariant operands (built once, VMEM-resident in-kernel) --
    w_p = jnp.pad(w.astype(jnp.float32), ((0, 0), (0, ac - A)))
    params = jnp.zeros((8, ac), jnp.float32)
    params = params.at[0, :A].set(b.astype(jnp.float32))
    params = params.at[1, :A].set(jnp.exp(log_std.astype(jnp.float32)))
    params = params.at[2, 0].set(jnp.sum(log_std.astype(jnp.float32))
                                 + 0.5 * A * _LOG2PI)

    x = x.astype(jnp.float32)                  # no-op for f32 inputs; no padding copy

    x_spec = pl.BlockSpec((tile, din), lambda i: (i, 0))     # streamed per tile
    w_spec = pl.BlockSpec((din, ac), lambda i: (0, 0))       # resident
    p_spec = pl.BlockSpec((8, ac), lambda i: (0, 0))         # resident
    out_spec = pl.BlockSpec((tile, ac), lambda i: (i, 0))

    if deterministic:
        kernel = functools.partial(_act_kernel_deterministic, action_dim=A)
        in_specs = [x_spec, w_spec, p_spec]
        operands = (x, w_p, params)
    else:
        if key is None:
            key = jax.random.PRNGKey(0)
        # Noise sampled once in the wrapper => reproducible regardless of tiling
        # or megacore layout, and no TPU-only PRNG primitives in the kernel.
        noise = jax.random.normal(key, (B, A), jnp.float32)
        noise = jnp.pad(noise, ((0, 0), (0, ac - A)))         # tiny [B, AC] array
        kernel = functools.partial(_act_kernel_stochastic, action_dim=A)
        n_spec = pl.BlockSpec((tile, ac), lambda i: (i, 0))
        in_specs = [x_spec, n_spec, w_spec, p_spec]
        operands = (x, noise, w_p, params)

    out = pl.pallas_call(
        kernel,
        out_shape=jax.ShapeDtypeStruct((B, ac), jnp.float32),
        grid=(num_tiles,),
        in_specs=in_specs,
        out_specs=out_spec,
        compiler_params=pltpu.CompilerParams(
            dimension_semantics=("parallel",),
            vmem_limit_bytes=vmem_limit,
        ),
    )(*operands)

    actions = out[:, :A]
    action_log_probs = out[:, A:A + 1]
    return actions, action_log_probs


if __name__ == "__main__":
    key = jax.random.PRNGKey(0)
    k_x, k_w, k_noise = jax.random.split(key, 3)

    batch = 8
    inputs_dim = 32      # network feature dim
    action_dim = 4       # action_space.shape[0]

    x = jax.random.normal(k_x, (batch, inputs_dim), jnp.float32)
    w = 0.1 * jax.random.normal(k_w, (inputs_dim, action_dim), jnp.float32)
    b = 0.05 * jnp.arange(action_dim, dtype=jnp.float32)
    log_std = -0.5 + 0.1 * jnp.arange(action_dim, dtype=jnp.float32)

    mean_ref = jnp.dot(x, w, precision=jax.lax.Precision.HIGHEST) + b[None, :]
    std_ref = jnp.exp(log_std)[None, :]
    const = jnp.sum(log_std) + 0.5 * action_dim * _LOG2PI

    # Deterministic path: actions == mean, logp == -const for every row.
    det_a, det_lp = act_layer_forward(x, w, b, log_std, deterministic=True)
    jax.block_until_ready((det_a, det_lp))
    assert det_a.shape == (batch, action_dim) and det_lp.shape == (batch, 1)
    assert jnp.allclose(det_a, mean_ref, atol=1e-3, rtol=1e-3), "deterministic actions mismatch"
    assert jnp.allclose(det_lp, -const * jnp.ones((batch, 1)), atol=1e-3), "deterministic logp mismatch"

    # Stochastic path: noise comes from the supplied key, so we can check exactly.
    sto_a, sto_lp = act_layer_forward(x, w, b, log_std, deterministic=False, key=k_noise)
    jax.block_until_ready((sto_a, sto_lp))
    noise = jax.random.normal(k_noise, (batch, action_dim), jnp.float32)
    exp_a = mean_ref + std_ref * noise
    exp_lp = -0.5 * jnp.sum(noise ** 2, axis=-1, keepdims=True) - const
    assert jnp.allclose(sto_a, exp_a, atol=1e-3, rtol=1e-3), "stochastic actions mismatch"
    assert jnp.allclose(sto_lp, exp_lp, atol=1e-3, rtol=1e-3), "stochastic logp mismatch"
    assert not jnp.allclose(sto_a, det_a, atol=1e-3), "stochastic path produced no noise"

    print("KERNEL_OK")
</pallas_src>

<mosaic_0001>
module attributes {stable_mosaic.version = 11 : i64} {
  func.func @_act_kernel_deterministic(%arg0: i32, %arg1: memref<8x32xf32, #tpu.memory_space<vmem>>, %arg2: memref<32x8xf32, #tpu.memory_space<vmem>>, %arg3: memref<8x8xf32, #tpu.memory_space<vmem>>, %arg4: memref<8x8xf32, #tpu.memory_space<vmem>>) attributes {dimension_semantics = [#tpu.dimension_semantics<parallel>], iteration_bounds = array<i64: 1>, scalar_prefetch = 0 : i64, scratch_operands = 0 : i64, tpu.core_type = #tpu.core_type<tc>, window_params = [{transform_indices = @transform_0, window_bounds = array<i64: 8, 32>}, {pipeline_mode = #tpu.pipeline_mode<synchronous>, transform_indices = @transform_1, window_bounds = array<i64: 32, 8>}, {pipeline_mode = #tpu.pipeline_mode<synchronous>, transform_indices = @transform_2, window_bounds = array<i64: 8, 8>}, {transform_indices = @transform_3, window_bounds = array<i64: 8, 8>}]} {
    %c0 = arith.constant 0 : index
    %c0_0 = arith.constant 0 : index
    %0 = vector.load %arg3[%c0, %c0_0] : memref<8x8xf32, #tpu.memory_space<vmem>>, vector<1x8xf32>
    %c2 = arith.constant 2 : index
    %c0_1 = arith.constant 0 : index
    %1 = vector.load %arg3[%c2, %c0_1] : memref<8x8xf32, #tpu.memory_space<vmem>>, vector<1x1xf32>
    %c0_2 = arith.constant 0 : index
    %c0_3 = arith.constant 0 : index
    %2 = vector.load %arg1[%c0_2, %c0_3] : memref<8x32xf32, #tpu.memory_space<vmem>>, vector<8x32xf32>
    %c0_4 = arith.constant 0 : index
    %c0_5 = arith.constant 0 : index
    %3 = vector.load %arg2[%c0_4, %c0_5] : memref<32x8xf32, #tpu.memory_space<vmem>>, vector<32x8xf32>
    %cst = arith.constant dense<0.000000e+00> : vector<8x8xf32>
    %4 = tpu.matmul %2, %3, %cst {dimension_numbers = #tpu.dot_dimension_numbers<[1], [0], [0], [1], [0, 0, 1, 1], [], []>} : vector<8x32xf32>, vector<32x8xf32>, vector<8x8xf32> -> vector<8x8xf32>
    %5 = vector.broadcast %0 : vector<1x8xf32> to vector<8x8xf32>
    %6 = arith.addf %4, %5 : vector<8x8xf32>
    %cst_6 = arith.constant 0.000000e+00 : f32
    %7 = vector.broadcast %cst_6 : f32 to vector<8x1xf32>
    %8 = vector.broadcast %1 : vector<1x1xf32> to vector<8x1xf32>
    %9 = arith.subf %7, %8 : vector<8x1xf32>
    %10 = tpu.iota {dimensions = array<i32: 1>} : vector<8x8xi32>
    %c4_i32 = arith.constant 4 : i32
    %11 = vector.broadcast %c4_i32 : i32 to vector<8x8xi32>
    %12 = arith.cmpi slt, %10, %11 : vector<8x8xi32>
    %c4_i32_7 = arith.constant 4 : i32
    %13 = vector.broadcast %c4_i32_7 : i32 to vector<8x8xi32>
    %14 = arith.cmpi eq, %10, %13 : vector<8x8xi32>
    %cst_8 = arith.constant 0.000000e+00 : f32
    %15 = vector.shape_cast %9 : vector<8x1xf32> to vector<8x1xf32>
    %16 = vector.broadcast %15 : vector<8x1xf32> to vector<8x8xf32>
    %17 = vector.broadcast %cst_8 : f32 to vector<8x8xf32>
    %18 = arith.select %14, %16, %17 : vector<8x8xi1>, vector<8x8xf32>
    %19 = arith.select %12, %6, %18 : vector<8x8xi1>, vector<8x8xf32>
    %c0_9 = arith.constant 0 : index
    %c0_10 = arith.constant 0 : index
    %20 = vector.load %arg4[%c0_9, %c0_10] : memref<8x8xf32, #tpu.memory_space<vmem>>, vector<8x8xf32>
    tpu.vector_store %arg4[%c0_9, %c0_10], %19 {strides = array<i32>} : memref<8x8xf32, #tpu.memory_space<vmem>>, vector<8x8xf32>,
    return
  }
  func.func @transform_0(%arg0: i32) -> (i32, i32) {
    %c0_i32 = arith.constant 0 : i32
    %c0_i32_0 = arith.constant 0 : i32
    return %arg0, %c0_i32 : i32, i32
  }
  func.func @transform_1(%arg0: i32) -> (i32, i32) {
    %c0_i32 = arith.constant 0 : i32
    %c0_i32_0 = arith.constant 0 : i32
    %c0_i32_1 = arith.constant 0 : i32
    return %c0_i32, %c0_i32_0 : i32, i32
  }
  func.func @transform_2(%arg0: i32) -> (i32, i32) {
    %c0_i32 = arith.constant 0 : i32
    %c0_i32_0 = arith.constant 0 : i32
    %c0_i32_1 = arith.constant 0 : i32
    return %c0_i32, %c0_i32_0 : i32, i32
  }
  func.func @transform_3(%arg0: i32) -> (i32, i32) {
    %c0_i32 = arith.constant 0 : i32
    %c0_i32_0 = arith.constant 0 : i32
    return %arg0, %c0_i32 : i32, i32
  }
}

</mosaic_0001>

<llo_original>
// kernel: tpu_custom_call.1
$region0: #{tpu_custom_call.1}
  #allocation0 [shape = 'u32[]', space=smem, size = 0x4, offset = 0x4, fixed_abs, tag = 'smem constant byte address 0x4 - core index']
  #allocation1 [shape = 'u32[144,128]{1,0:T(1,128)}', space=vmem, size = 0x12000, scoped, tag = 'internal scratch']
  %s0 = inlined_call_operand.vmem [shape: f32[8,32], index: 0, kind: input, shape index: {}]
  %s1 = inlined_call_operand.vmem [shape: f32[32,8], index: 1, kind: input, shape index: {}]
  %s2 = inlined_call_operand.vmem [shape: f32[8,8], index: 2, kind: input, shape index: {}]
  %s3 = inlined_call_operand.hbm [shape: f32[8,8], index: 3, kind: output, shape index: {}]
  %s4 = sld [smem:[#allocation0]]
  $region22: #{tpu_custom_call.1} parent=0
    _
  %s6 = ssub.s32 1, %s4
  %s7 = scalar_select 0, %s6, %s4
  $region1: #{tpu_custom_call.1} parent=0
    #allocation2 [shape = 'u8[4096]{0}', space=vmem, size = 0x1000, scoped, tag = 'output window, operand 0, single buffered']
    #allocation3 [shape = 's32[1]{0}', space=sflag, size = 0x4, scoped, tag = 'scoped memory for tpu_custom_call.1']
    %8 = vsyncpa [#allocation3], 0
    // Predicated region
    $region2: #{tpu_custom_call.1} parent=1 // pred_check
      _
    $region3: #{tpu_custom_call.1} parent=1 // pred_check_branch
      %10 = sbr.rel (0) target = $region5
    $region4: #{tpu_custom_call.1} parent=1 // pred_region
      _
    $region5: #{tpu_custom_call.1} parent=1 // pred_fallthru
      _
    // Predicated region
    $region6: #{tpu_custom_call.1} parent=1 // pred_check
      _
    $region7: #{tpu_custom_call.1} parent=1 // pred_check_branch
      %12 = sbr.rel (0) target = $region9
    $region8: #{tpu_custom_call.1} parent=1 // pred_region
      _
    $region9: #{tpu_custom_call.1} parent=1 // pred_fallthru
      _
    // Predicated region
    $region10: #{tpu_custom_call.1} parent=1 // pred_check
      _
    $region11: #{tpu_custom_call.1} parent=1 // pred_check_branch
      %14 = sbr.rel (0) target = $region13
    $region12: #{tpu_custom_call.1} parent=1 // pred_region
      _
    $region13: #{tpu_custom_call.1} parent=1 // pred_fallthru
      _
    %v15 = vld [vmem:[%s2] sm:$0x1]
    %v16 = vld [vmem:[%s2 + $0x2] sm:$0x1]
    %v17 = vld [vmem:[%s0] sm:$0xff]
    %v18 = vld [vmem:[%s1] sm:$0xff]
    %v19 = vld [vmem:[%s1 + $0x8] sm:$0xff]
    %v20 = vld [vmem:[%s1 + $0x10] sm:$0xff]
    %v21 = vld [vmem:[%s1 + $0x18] sm:$0xff]
    %v22 = vlaneseq
    %v23 = vshrl.u32 %v22, 7
    %v24 = vsub.s32 0, %v23
    %v25 = vrot.slane %v15, %v24
    %vm26 = vcmask 261120
    %v28 = vsel %vm26, %v17, 0
    %30 = vmatprep.subr.mxu0 0.0
    %31 = vmatpush1.msra.mxu0 0.0
    %32 = vmatprep.subr.mxu0 0.0
    %33 = vmatpush1.msra.mxu0 0.0
    %34 = vmatprep.subr.mxu0 0.0
    %35 = vmatpush1.msra.mxu0 0.0
    %36 = vmatprep.subr.mxu0 0.0
    %37 = vmatpush1.msra.mxu0 0.0
    %38 = vmatprep.subr.mxu0 0.0
    %39 = vmatpush1.msra.mxu0 0.0
    %40 = vmatprep.subr.mxu0 0.0
    %41 = vmatpush1.msra.mxu0 0.0
    %42 = vmatprep.subr.mxu0 0.0
    %43 = vmatpush1.msra.mxu0 0.0
    %44 = vmatprep.subr.mxu0 0.0
    %45 = vmatpush1.msra.mxu0 0.0
    %46 = vmatprep.subr.mxu0 0.0
    %47 = vmatpush1.msra.mxu0 0.0
    %48 = vmatprep.subr.mxu0 0.0
    %49 = vmatpush1.msra.mxu0 0.0
    %50 = vmatprep.subr.mxu0 0.0
    %51 = vmatpush1.msra.mxu0 0.0
    %52 = vmatprep.subr.mxu0 0.0
    %53 = vmatpush1.msra.mxu0 0.0
    %54 = vmatprep.subr.mxu0 0.0
    %55 = vmatpush1.msra.mxu0 %v21
    %56 = vmatprep.subr.mxu0 0.0
    %57 = vmatpush1.msra.mxu0 %v20
    %58 = vmatprep.subr.mxu0 0.0
    %59 = vmatpush1.msra.mxu0 %v19
    %60 = vmatprep.subr.mxu0 0.0
    %61 = vmatpush1.msra.mxu0 %v18
    %62 = vmatprep.subr.mxu0 0.0
    %63 = vmatpush2.msra.mxu0 0.0
    %64 = vmatprep.subr.mxu0 0.0
    %65 = vmatpush2.msra.mxu0 0.0
    %66 = vmatprep.subr.mxu0 0.0
    %67 = vmatpush2.msra.mxu0 0.0
    %68 = vmatprep.subr.mxu0 0.0
    %69 = vmatpush2.msra.mxu0 0.0
    %70 = vmatprep.subr.mxu0 0.0
    %71 = vmatpush2.msra.mxu0 0.0
    %72 = vmatprep.subr.mxu0 0.0
    %73 = vmatpush2.msra.mxu0 0.0
    %74 = vmatprep.subr.mxu0 0.0
    %75 = vmatpush2.msra.mxu0 0.0
    %76 = vmatprep.subr.mxu0 0.0
    %77 = vmatpush2.msra.mxu0 0.0
    %78 = vmatprep.subr.mxu0 0.0
    %79 = vmatpush2.msra.mxu0 0.0
    %80 = vmatprep.subr.mxu0 0.0
    %81 = vmatpush2.msra.mxu0 0.0
    %82 = vmatprep.subr.mxu0 0.0
    %83 = vmatpush2.msra.mxu0 0.0
    %84 = vmatprep.subr.mxu0 0.0
    %85 = vmatpush2.msra.mxu0 0.0
    %86 = vmatprep.subr.mxu0 0.0
    %87 = vmatpush2.msra.mxu0 0.0
    %88 = vmatprep.subr.mxu0 0.0
    %89 = vmatpush2.msra.mxu0 0.0
    %90 = vmatprep.subr.mxu0 0.0
    %91 = vmatpush2.msra.mxu0 0.0
    %92 = vmatprep.subr.mxu0 0.0
    %93 = vmatpush2.msra.mxu0 0.0
    %94 = vmatprep.mubr.f32.mxu0 0.0
    %95 = vmatmul.mubr.f32.gmra.mxu0 %v28
    %v96 = vpop.f32.mrf.mxu0
    %v97 = vadd.f32 %v25, %v96
    %v98 = vpop.f32.mrf.mxu0
    %99 = vdwg.mxu0
    %v100 = vlaneseq
    %v101 = vshrl.u32 %v100, 7
    %v102 = vsub.s32 0, %v101
    %v103 = vrot.slane %v16, %v102
    %v104 = vsub.f32 0.0, %v103
    %v105 = vlaneseq
    %v106 = vand.u32 %v105, 127
    %vm107 = vcmp.lt.s32.totalorder %v106, 4
    %vm108 = vcmp.eq.s32.totalorder %v106, 4
    %110 = vset.pattern.permute.xlu0 0
    %111 = vperm.xlu0 %110, %v104
    %v112 = vpop.permute.xlu0 %111
    %v114 = vsel %vm108, %v112, 0.0
    %v115 = vsel %vm107, %v97, %v114
    %vm116 = vcmask 64512
    %117 = vst.msk [vmem:[#allocation2] sm:$0xff] %vm116, %v115
    // Predicated region
    $region14: #{tpu_custom_call.1} parent=1 // pred_check
      _
    $region15: #{tpu_custom_call.1} parent=1 // pred_check_branch
      %119 = sbr.rel (0) target = $region17
    $region16: #{tpu_custom_call.1} parent=1 // pred_region
      %s121 = ssub.s32 128, 128
      %122 = vsyncadd [#allocation3], %s121
      %s124 = sshll.u32 [#allocation2], 4
      %s125 = int_to_ptr.vmem [resolvable:$true] %s124
      %127 = dma.vmem_to_hbm [thread:$0]  %s125, 128, %s3, [#allocation3]
    $region17: #{tpu_custom_call.1} parent=1 // pred_fallthru
      _
    // Predicated region
    $region18: #{tpu_custom_call.1} parent=1 // pred_check
      _
    $region19: #{tpu_custom_call.1} parent=1 // pred_check_branch
      %129 = sbr.rel (0) target = $region21
    $region20: #{tpu_custom_call.1} parent=1 // pred_region
      %130 = dma.done [#allocation3], 128
    $region21: #{tpu_custom_call.1} parent=1 // pred_fallthru
      _
    %131 = vsyncpa [#allocation3], 1

</llo_original>
